<compile_context>
chip_gen: v7x
topology: tpu7x:2x2x1
jax: 0.10.0
libtpu: 0.0.40
codegen_flags: <defaults>
</compile_context>

<pallas_src>
import functools

import jax
import jax.numpy as jnp
from jax.experimental import pallas as pl
from jax.experimental.pallas import tpu as pltpu

_LANES = 128
_TR_MAX = 2048   # rows per reduction tile -> 1 MiB f32 per input per grid step


def _pow_static(v, p):
    """x**p with static python p; integer p stays on the VPU (no EUP pow)."""
    pf = float(p)
    if pf == 1.0:
        return v
    if pf == 2.0:
        return v * v
    if pf.is_integer() and 1.0 < pf <= 8.0:
        r = v
        for _ in range(int(pf) - 1):
            r = r * v
        return r
    # TODO(synk): truly fractional p lowers through transcendental pow (EUP).
    return jnp.power(v, p)


def _dice_kernel(x_ref, y_ref, o_ref, inter_acc, union_acc, *,
                 p, rows_total, rows_per_block, acc_rows, full_blocks,
                 needs_mask):
    c = pl.program_id(0)           # core-split chunk of the reduction axis
    k = pl.program_id(2)           # row-tile step within this chunk
    nk = pl.num_programs(2)
    blk = c * nk + k               # global row-tile index

    @pl.when(k == 0)
    def _init():
        inter_acc[...] = jnp.zeros_like(inter_acc)
        union_acc[...] = jnp.zeros_like(union_acc)

    x = x_ref[0].astype(jnp.float32)   # (TR, 128)
    y = y_ref[0].astype(jnp.float32)   # (TR, 128)
    groups = rows_per_block // acc_rows

    def _accumulate(masked):
        xy = x * y
        up = _pow_static(x, p) + _pow_static(y, p)
        if masked:
            # Row-granular mask (no per-element index math, no i32 overflow).
            row = jax.lax.broadcasted_iota(
                jnp.int32, (rows_per_block, _LANES), 0)
            valid = (blk * rows_per_block + row) < rows_total
            xy = jnp.where(valid, xy, 0.0)
            up = jnp.where(valid, up, 0.0)
        # Fold the full tile down to one (acc_rows, 128) vreg-aligned partial
        # (pure VPU adds, no XLU) so the accumulator RMW is a couple of vregs
        # instead of the whole tile.
        inter_acc[...] += xy.reshape(groups, acc_rows, _LANES).sum(axis=0)
        union_acc[...] += up.reshape(groups, acc_rows, _LANES).sum(axis=0)

    if needs_mask:
        @pl.when(blk < full_blocks)
        def _steady():
            _accumulate(False)

        @pl.when(blk >= full_blocks)
        def _tail():
            _accumulate(True)
    else:
        _accumulate(False)

    @pl.when(k == nk - 1)
    def _finalize():
        inter = jnp.sum(inter_acc[...])
        union = jnp.sum(union_acc[...])
        lane = jax.lax.broadcasted_iota(jnp.int32, o_ref.shape, 3)
        # Lane-dense output block: lane 0 = inter partial, lane 1 = union partial.
        o_ref[...] = jnp.where(lane == 0, inter,
                               jnp.where(lane == 1, union, 0.0))


def dice_loss_pallas(x, y, *, reduction="mean", p=2.0, smooth=1.0, eps=1e-8,
                     tile_rows=_TR_MAX):
    if x.ndim < 4:
        raise ValueError(f"invalid input size {x.shape} (dim must be > 3)")
    if x.shape != y.shape:
        raise ValueError(f"input/target shapes must match: {x.shape} vs {y.shape}")
    reduction = reduction.lower()
    if reduction not in ("mean", "sum", "none"):
        raise ValueError(f"bad reduction {reduction}")

    B = x.shape[0]
    L = 1
    for d in x.shape[1:]:
        L *= d

    # Free metadata reshape; no wrapper-side astype (kernel casts per tile).
    xf = jnp.reshape(x, (B, L))
    yf = jnp.reshape(y, (B, L))

    Lp = pl.cdiv(L, _LANES) * _LANES
    if Lp != L:
        if not p > 0:
            # Padded zeros rely on 0**p == 0, which needs p > 0.
            raise ValueError("p must be > 0 for lane-unaligned inputs")
        # TODO(synk): this rare unaligned-tail pad re-materializes the inputs in
        # HBM; the <128-element tail could instead be summed in the wrapper.
        xf = jnp.pad(xf, ((0, 0), (0, Lp - L)))
        yf = jnp.pad(yf, ((0, 0), (0, Lp - L)))

    R = Lp // _LANES
    x3 = jnp.reshape(xf, (B, R, _LANES))
    y3 = jnp.reshape(yf, (B, R, _LANES))

    TR = R if R <= tile_rows else tile_rows        # full dim or multiple of 8
    NK = pl.cdiv(R, TR)                            # total row-tiles
    NC = 2 if NK >= 2 else 1                       # split reduction over v7x TCs
    KPC = pl.cdiv(NK, NC)                          # row-tiles per core
    NKP = NC * KPC                                 # padded tile count
    full_blocks = R // TR                          # tiles with no invalid rows
    needs_mask = NKP > full_blocks
    acc_rows = 8 if TR % 8 == 0 else TR            # vreg-folded accumulator rows

    if NKP == NK:
        def in_map(c, b, k):
            return (b, c * KPC + k, 0)
    else:
        def in_map(c, b, k):
            # Clamp fully-out-of-range tiles (their contribution is masked).
            return (b, jnp.minimum(c * KPC + k, NK - 1), 0)

    def _make_in_spec():
        if KPC >= 3:
            try:
                return pl.BlockSpec((1, TR, _LANES), in_map,
                                    pipeline_mode=pl.Buffered(3))
            except TypeError:   # jax without pipeline_mode: default buffering
                pass
        return pl.BlockSpec((1, TR, _LANES), in_map)

    in_spec = _make_in_spec()

    kernel = functools.partial(
        _dice_kernel, p=p, rows_total=R, rows_per_block=TR, acc_rows=acc_rows,
        full_blocks=full_blocks, needs_mask=needs_mask)

    out = pl.pallas_call(
        kernel,
        out_shape=jax.ShapeDtypeStruct((NC, B, 1, _LANES), jnp.float32),
        grid_spec=pltpu.PrefetchScalarGridSpec(
            num_scalar_prefetch=0,
            grid=(NC, B, KPC),
            in_specs=[in_spec, in_spec],
            out_specs=pl.BlockSpec((1, 1, 1, _LANES),
                                   lambda c, b, k: (c, b, 0, 0)),
            scratch_shapes=[
                pltpu.VMEM((acc_rows, _LANES), jnp.float32),   # sum(x*y) partial
                pltpu.VMEM((acc_rows, _LANES), jnp.float32),   # sum(x^p + y^p)
            ],
        ),
        compiler_params=pltpu.CompilerParams(
            dimension_semantics=("parallel", "parallel", "arbitrary")),
    )(x3, y3)

    # Combine the per-core partial sums and do the tiny dice math in the wrapper.
    inter = jnp.sum(out[:, :, 0, 0], axis=0)       # (B,)
    union = jnp.sum(out[:, :, 0, 1], axis=0)       # (B,)
    dice = (2.0 * inter + smooth) / (union + smooth + eps)
    loss = 1.0 - dice

    if reduction == "mean":
        return jnp.mean(loss)
    if reduction == "sum":
        return jnp.sum(loss)
    return loss


def _dice_loss_ref(x, y, reduction="mean", p=2.0, smooth=1.0, eps=1e-8):
    B = x.shape[0]
    xf = jnp.reshape(x, (B, -1)).astype(jnp.float32)
    yf = jnp.reshape(y, (B, -1)).astype(jnp.float32)
    inter = jnp.sum(xf * yf, axis=1)
    union = jnp.sum(xf ** p, axis=1) + jnp.sum(yf ** p, axis=1)
    dice = (2.0 * inter + smooth) / (union + smooth + eps)
    loss = 1.0 - dice
    if reduction == "mean":
        return jnp.mean(loss)
    if reduction == "sum":
        return jnp.sum(loss)
    return loss


if __name__ == "__main__":
    key = jax.random.PRNGKey(0)
    k1, k2, k3, k4 = jax.random.split(key, 4)

    # --- Small NCHW demo (lane-aligned, single-tile fast path). ---
    B, C, H, W = 2, 4, 16, 16
    x = jax.random.normal(k1, (B, C, H, W), dtype=jnp.float32)       # scores
    labels = jax.random.randint(k2, (B, H, W), 0, C)
    target = jax.nn.one_hot(labels, C, dtype=jnp.float32)            # (B,H,W,C)
    target = jnp.transpose(target, (0, 3, 1, 2))                     # NCHW

    for red in ("mean", "sum", "none"):
        out = jax.block_until_ready(dice_loss_pallas(x, target, reduction=red))
        ref = _dice_loss_ref(x, target, reduction=red)
        assert jnp.allclose(out, ref, rtol=1e-5, atol=1e-5), (red, out, ref)

    # --- bf16 inputs: no wrapper upcast, per-tile cast inside the kernel. ---
    out_bf = jax.block_until_ready(
        dice_loss_pallas(x.astype(jnp.bfloat16), target.astype(jnp.bfloat16)))
    ref_bf = _dice_loss_ref(x.astype(jnp.bfloat16), target.astype(jnp.bfloat16))
    assert jnp.allclose(out_bf, ref_bf, rtol=2e-3, atol=2e-3), (out_bf, ref_bf)

    # --- Unaligned L + multi-tile reduction + core split + masking paths. ---
    B2, C2, H2, W2 = 2, 3, 60, 60          # L = 10800 (not a multiple of 128)
    x2 = jax.random.normal(k3, (B2, C2, H2, W2), dtype=jnp.float32)
    y2 = jax.nn.sigmoid(jax.random.normal(k4, (B2, C2, H2, W2), dtype=jnp.float32))
    ref2 = _dice_loss_ref(x2, y2, reduction="none")

    # 6 row-tiles -> 2 cores x 3 steps (exercises Buffered(3) + last-tile mask).
    out2 = jax.block_until_ready(
        dice_loss_pallas(x2, y2, reduction="none", tile_rows=16))
    assert jnp.allclose(out2, ref2, rtol=1e-5, atol=1e-5), (out2, ref2)

    # 3 row-tiles -> padded to 2 cores x 2 steps (exercises index-map clamp).
    out3 = jax.block_until_ready(
        dice_loss_pallas(x2, y2, reduction="mean", tile_rows=32))
    ref3 = _dice_loss_ref(x2, y2, reduction="mean")
    assert jnp.allclose(out3, ref3, rtol=1e-5, atol=1e-5), (out3, ref3)

    print("KERNEL_OK")
</pallas_src>

<mosaic_0001>
module attributes {stable_mosaic.version = 11 : i64} {
  func.func @_dice_kernel(%arg0: i32, %arg1: i32, %arg2: i32, %arg3: memref<1x8x128xf32, #tpu.memory_space<vmem>>, %arg4: memref<1x8x128xf32, #tpu.memory_space<vmem>>, %arg5: memref<1x1x1x128xf32, #tpu.memory_space<vmem>>, %arg6: memref<8x128xf32, #tpu.memory_space<vmem>>, %arg7: memref<8x128xf32, #tpu.memory_space<vmem>>) attributes {dimension_semantics = [#tpu.dimension_semantics<parallel>, #tpu.dimension_semantics<parallel>, #tpu.dimension_semantics<arbitrary>], iteration_bounds = array<i64: 1, 2, 1>, scalar_prefetch = 0 : i64, scratch_operands = 2 : i64, tpu.core_type = #tpu.core_type<tc>, window_params = [{transform_indices = @transform_0, window_bounds = array<i64: 1, 8, 128>}, {transform_indices = @transform_1, window_bounds = array<i64: 1, 8, 128>}, {transform_indices = @transform_2, window_bounds = array<i64: 1, 1, 1, 128>}]} {
    %c0_i32 = arith.constant 0 : i32
    %0 = arith.cmpi eq, %arg2, %c0_i32 : i32
    %1 = arith.extui %0 : i1 to i32
    %c0_i32_0 = arith.constant 0 : i32
    %2 = arith.cmpi ne, %1, %c0_i32_0 : i32
    scf.if %2 {
      %cst_17 = arith.constant 0.000000e+00 : f32
      %24 = vector.broadcast %cst_17 : f32 to vector<8x128xf32>
      %c0_18 = arith.constant 0 : index
      %c0_19 = arith.constant 0 : index
      %25 = vector.load %arg6[%c0_18, %c0_19] : memref<8x128xf32, #tpu.memory_space<vmem>>, vector<8x128xf32>
      tpu.vector_store %arg6[%c0_18, %c0_19], %24 {strides = array<i32>} : memref<8x128xf32, #tpu.memory_space<vmem>>, vector<8x128xf32>,
      %cst_20 = arith.constant 0.000000e+00 : f32
      %26 = vector.broadcast %cst_20 : f32 to vector<8x128xf32>
      %c0_21 = arith.constant 0 : index
      %c0_22 = arith.constant 0 : index
      %27 = vector.load %arg7[%c0_21, %c0_22] : memref<8x128xf32, #tpu.memory_space<vmem>>, vector<8x128xf32>
      tpu.vector_store %arg7[%c0_21, %c0_22], %26 {strides = array<i32>} : memref<8x128xf32, #tpu.memory_space<vmem>>, vector<8x128xf32>,
    } else {
    }
    %c0 = arith.constant 0 : index
    %c0_1 = arith.constant 0 : index
    %c0_2 = arith.constant 0 : index
    %3 = vector.load %arg3[%c0, %c0_1, %c0_2] : memref<1x8x128xf32, #tpu.memory_space<vmem>>, vector<1x8x128xf32>
    %4 = vector.shape_cast %3 : vector<1x8x128xf32> to vector<8x128xf32>
    %c0_3 = arith.constant 0 : index
    %c0_4 = arith.constant 0 : index
    %c0_5 = arith.constant 0 : index
    %5 = vector.load %arg4[%c0_3, %c0_4, %c0_5] : memref<1x8x128xf32, #tpu.memory_space<vmem>>, vector<1x8x128xf32>
    %6 = vector.shape_cast %5 : vector<1x8x128xf32> to vector<8x128xf32>
    %7 = arith.mulf %4, %6 : vector<8x128xf32>
    %8 = arith.mulf %4, %4 : vector<8x128xf32>
    %9 = arith.mulf %6, %6 : vector<8x128xf32>
    %10 = arith.addf %8, %9 : vector<8x128xf32>
    %c0_6 = arith.constant 0 : index
    %c0_7 = arith.constant 0 : index
    %11 = vector.load %arg6[%c0_6, %c0_7] : memref<8x128xf32, #tpu.memory_space<vmem>>, vector<8x128xf32>
    %12 = vector.shape_cast %7 : vector<8x128xf32> to vector<1x8x128xf32>
    %cst = arith.constant dense<0.000000e+00> : vector<8x128xf32>
    %13 = vector.multi_reduction <add>, %12, %cst [0] : vector<1x8x128xf32> to vector<8x128xf32>
    %14 = arith.addf %11, %13 : vector<8x128xf32>
    %c0_8 = arith.constant 0 : index
    %c0_9 = arith.constant 0 : index
    %15 = vector.load %arg6[%c0_8, %c0_9] : memref<8x128xf32, #tpu.memory_space<vmem>>, vector<8x128xf32>
    tpu.vector_store %arg6[%c0_8, %c0_9], %14 {strides = array<i32>} : memref<8x128xf32, #tpu.memory_space<vmem>>, vector<8x128xf32>,
    %c0_10 = arith.constant 0 : index
    %c0_11 = arith.constant 0 : index
    %16 = vector.load %arg7[%c0_10, %c0_11] : memref<8x128xf32, #tpu.memory_space<vmem>>, vector<8x128xf32>
    %17 = vector.shape_cast %10 : vector<8x128xf32> to vector<1x8x128xf32>
    %cst_12 = arith.constant dense<0.000000e+00> : vector<8x128xf32>
    %18 = vector.multi_reduction <add>, %17, %cst_12 [0] : vector<1x8x128xf32> to vector<8x128xf32>
    %19 = arith.addf %16, %18 : vector<8x128xf32>
    %c0_13 = arith.constant 0 : index
    %c0_14 = arith.constant 0 : index
    %20 = vector.load %arg7[%c0_13, %c0_14] : memref<8x128xf32, #tpu.memory_space<vmem>>, vector<8x128xf32>
    tpu.vector_store %arg7[%c0_13, %c0_14], %19 {strides = array<i32>} : memref<8x128xf32, #tpu.memory_space<vmem>>, vector<8x128xf32>,
    %c0_i32_15 = arith.constant 0 : i32
    %21 = arith.cmpi eq, %arg2, %c0_i32_15 : i32
    %22 = arith.extui %21 : i1 to i32
    %c0_i32_16 = arith.constant 0 : i32
    %23 = arith.cmpi ne, %22, %c0_i32_16 : i32
    scf.if %23 {
      %c0_17 = arith.constant 0 : index
      %c0_18 = arith.constant 0 : index
      %24 = vector.load %arg6[%c0_17, %c0_18] : memref<8x128xf32, #tpu.memory_space<vmem>>, vector<8x128xf32>
      %25 = vector.shape_cast %24 : vector<8x128xf32> to vector<1x8x128xf32>
      %cst_19 = arith.constant dense<0.000000e+00> : vector<1xf32>
      %26 = vector.multi_reduction <add>, %25, %cst_19 [1, 2] : vector<1x8x128xf32> to vector<1xf32>
      %27 = vector.shape_cast %26 : vector<1xf32> to vector<1x1x1xf32>
      %28 = vector.extract %27[0, 0, 0] : f32 from vector<1x1x1xf32>
      %c0_20 = arith.constant 0 : index
      %c0_21 = arith.constant 0 : index
      %29 = vector.load %arg7[%c0_20, %c0_21] : memref<8x128xf32, #tpu.memory_space<vmem>>, vector<8x128xf32>
      %30 = vector.shape_cast %29 : vector<8x128xf32> to vector<1x8x128xf32>
      %cst_22 = arith.constant dense<0.000000e+00> : vector<1xf32>
      %31 = vector.multi_reduction <add>, %30, %cst_22 [1, 2] : vector<1x8x128xf32> to vector<1xf32>
      %32 = vector.shape_cast %31 : vector<1xf32> to vector<1x1x1xf32>
      %33 = vector.extract %32[0, 0, 0] : f32 from vector<1x1x1xf32>
      %34 = tpu.iota {dimensions = array<i32: 3>} : vector<1x1x1x128xi32>
      %c0_i32_23 = arith.constant 0 : i32
      %35 = vector.broadcast %c0_i32_23 : i32 to vector<1x1x1x128xi32>
      %36 = arith.cmpi eq, %34, %35 : vector<1x1x1x128xi32>
      %c1_i32 = arith.constant 1 : i32
      %37 = vector.broadcast %c1_i32 : i32 to vector<1x1x1x128xi32>
      %38 = arith.cmpi eq, %34, %37 : vector<1x1x1x128xi32>
      %cst_24 = arith.constant 0.000000e+00 : f32
      %39 = vector.broadcast %33 : f32 to vector<1x1x1x128xf32>
      %40 = vector.broadcast %cst_24 : f32 to vector<1x1x1x128xf32>
      %41 = arith.select %38, %39, %40 : vector<1x1x1x128xi1>, vector<1x1x1x128xf32>
      %42 = vector.broadcast %28 : f32 to vector<1x1x1x128xf32>
      %43 = arith.select %36, %42, %41 : vector<1x1x1x128xi1>, vector<1x1x1x128xf32>
      %c0_25 = arith.constant 0 : index
      %c0_26 = arith.constant 0 : index
      %c0_27 = arith.constant 0 : index
      %c0_28 = arith.constant 0 : index
      %44 = vector.load %arg5[%c0_25, %c0_26, %c0_27, %c0_28] : memref<1x1x1x128xf32, #tpu.memory_space<vmem>>, vector<1x1x1x128xf32>
      tpu.vector_store %arg5[%c0_25, %c0_26, %c0_27, %c0_28], %43 {strides = array<i32>} : memref<1x1x1x128xf32, #tpu.memory_space<vmem>>, vector<1x1x1x128xf32>,
    } else {
    }
    return
  }
  func.func @transform_0(%arg0: i32, %arg1: i32, %arg2: i32) -> (i32, i32, i32) {
    %c1_i32 = arith.constant 1 : i32
    %0 = arith.muli %arg0, %c1_i32 : i32
    %1 = arith.addi %0, %arg2 : i32
    %c0_i32 = arith.constant 0 : i32
    %c0_i32_0 = arith.constant 0 : i32
    return %arg1, %1, %c0_i32 : i32, i32, i32
  }
  func.func @transform_1(%arg0: i32, %arg1: i32, %arg2: i32) -> (i32, i32, i32) {
    %c1_i32 = arith.constant 1 : i32
    %0 = arith.muli %arg0, %c1_i32 : i32
    %1 = arith.addi %0, %arg2 : i32
    %c0_i32 = arith.constant 0 : i32
    %c0_i32_0 = arith.constant 0 : i32
    return %arg1, %1, %c0_i32 : i32, i32, i32
  }
  func.func @transform_2(%arg0: i32, %arg1: i32, %arg2: i32) -> (i32, i32, i32, i32) {
    %c0_i32 = arith.constant 0 : i32
    %c0_i32_0 = arith.constant 0 : i32
    %c0_i32_1 = arith.constant 0 : i32
    return %arg0, %arg1, %c0_i32, %c0_i32_0 : i32, i32, i32, i32
  }
}

</mosaic_0001>

<llo_original>
// kernel: tpu_custom_call.1
$region0: #{tpu_custom_call.1}
  #allocation0 [shape = 'u32[]', space=smem, size = 0x4, offset = 0x4, fixed_abs, tag = 'smem constant byte address 0x4 - core index']
  #allocation1 [shape = 'u32[144,128]{1,0:T(1,128)}', space=vmem, size = 0x12000, scoped, tag = 'internal scratch']
  #allocation2 [shape = 'f32[8,128]{1,0:T(8,128)}', space=vmem, size = 0x1000, scoped, tag = 'scratch operand']
  #allocation3 [shape = 'f32[8,128]{1,0:T(8,128)}', space=vmem, size = 0x1000, scoped, tag = 'scratch operand']
  %s0 = inlined_call_operand.hbm [shape: f32[2,8,128], index: 0, kind: input, shape index: {}]
  %s1 = inlined_call_operand.hbm [shape: f32[2,8,128], index: 1, kind: input, shape index: {}]
  %s2 = inlined_call_operand.hbm [shape: f32[1,2,1,128], index: 2, kind: output, shape index: {}]
  %s3 = sld [smem:[#allocation0]]
  $region57: #{tpu_custom_call.1} parent=0
    _
  %s5 = ssub.s32 1, %s3
  %s6 = scalar_select 0, %s5, %s3
  $region1: #{tpu_custom_call.1} parent=0
    #allocation4 [shape = 'u8[8192]{0}', space=vmem, size = 0x2000, scoped, tag = 'input window, operand 0']
    #allocation5 [shape = 's32[2]{0}', space=sflag, size = 0x8, scoped, tag = 'scoped memory for tpu_custom_call.1']
    #allocation6 [shape = 's32[2]{0}', space=sflag, size = 0x8, scoped, tag = 'scoped memory for tpu_custom_call.1']
    #allocation7 [shape = 'u8[8192]{0}', space=vmem, size = 0x2000, scoped, tag = 'input window, operand 1']
    #allocation8 [shape = 's32[2]{0}', space=sflag, size = 0x8, scoped, tag = 'scoped memory for tpu_custom_call.1']
    #allocation9 [shape = 'u8[1024]{0}', space=vmem, size = 0x400, scoped, tag = 'output window, operand 0']
    %7 = vsyncpa [#allocation5], 0
    %s8 = scalar_lea.sflag [#allocation5], 1
    %9 = vsyncpa %s8, 0
    %10 = vsyncpa [#allocation8], 0
    %s11 = scalar_lea.sflag [#allocation8], 1
    %12 = vsyncpa %s11, 0
    %13 = vsyncpa [#allocation6], 0
    %s14 = scalar_lea.sflag [#allocation6], 1
    %15 = vsyncpa %s14, 0
    loop: start=0, step=1, limit=4
    $region2: #{tpu_custom_call.1} parent=1 // loop_pre_header
      _
    $region3: #{tpu_custom_call.1} parent=1 // loop_header
      %s17 = sphi 0, %s21
      %p18 = scmp.ge.s32.totalorder %s17, 4
      %s24 = sphi 0, %s43
      %s25 = sphi 0, %s39
      %s26 = sphi 0, %s35
      %s27 = sphi 0, %s24
      %s28 = sphi 0, %s25
      %s29 = sphi 0, %s26
      %s30 = sphi 0, %s27
      %s31 = sphi 0, %s28
      %s32 = sphi 0, %s29
      %s50 = sphi 0, %s52
      %s53 = sphi 0, %s50
      %s54 = sphi 0, %s53
      %s70 = sphi 0, %s54
      %s80 = sphi 0, %s82
      %s83 = sphi 0, %s80
      %s84 = sphi 0, %s83
      %s100 = sphi 0, %s84
      %s108 = sphi 0, %s110
      %s111 = sphi 0, %s108
      %s112 = sphi 0, %s111
      %s128 = sphi 0, %s112
    $region4: #{tpu_custom_call.1} parent=1 // loop_header_branch
      %20 = sbr.rel (%p18) target = $region8
    $region5: #{tpu_custom_call.1} parent=1 // loop_body
      %s22 = ssub.s32 %s17, 1
      %s23 = ssub.s32 %s17, 2
      %s33 = sadd.s32 1, %s26
      %p34 = scmp.ge.s32.totalorder %s33, 1
      %s35 = scalar_select %p34, 0, %s33
      %s36 = sadd.s32 1, %s25
      %s37 = scalar_select %p34, %s36, %s25
      %p38 = scmp.ge.s32.totalorder %s37, 2
      %s39 = scalar_select %p38, 0, %s37
      %s40 = sadd.s32 1, %s24
      %s41 = scalar_select %p38, %s40, %s24
      %p42 = scmp.ge.s32.totalorder %s41, 1
      %s43 = scalar_select %p42, 0, %s41
      %s44 = sadd.s32 %s24, %s26
      %s45 = sadd.s32 %s43, %s35
      %s46 = ssub.s32 %s25, %s39
      %s47 = ssub.s32 %s44, %s45
      %s48 = sor.u32 %s46, %s47
      %p49 = scmp.eq.s32.totalorder %s48, 0
      %s51 = sadd.s32 %s50, 1
      %s52 = scalar_select %p49, %s50, %s51
      %p55 = pneg %p49
      %p56 = scmp.eq.s32.totalorder %s17, 1
      %p57 = por %p55, %p56
      %p58 = scmp.ne.s32.totalorder %s50, %s53
      %p59 = scmp.eq.s32.totalorder %s17, 0
      %p60 = por %p58, %p59
      %p61 = scmp.ne.s32.totalorder %s50, %s53
      %p62 = scmp.eq.s32.totalorder %s22, 1
      %p63 = por %p61, %p62
      %p64 = scmp.ne.s32.totalorder %s53, %s54
      %p65 = scmp.eq.s32.totalorder %s22, 0
      %p66 = por %p64, %p65
      %p67 = scmp.ne.s32.totalorder %s53, %s54
      %p68 = scmp.eq.s32.totalorder %s23, 1
      %p69 = por %p67, %p68
      %p71 = scmp.ne.s32.totalorder %s54, %s70
      %p72 = scmp.eq.s32.totalorder %s23, 0
      %p73 = por %p71, %p72
      %s74 = sadd.s32 %s24, %s26
      %s75 = sadd.s32 %s43, %s35
      %s76 = ssub.s32 %s25, %s39
      %s77 = ssub.s32 %s74, %s75
      %s78 = sor.u32 %s76, %s77
      %p79 = scmp.eq.s32.totalorder %s78, 0
      %s81 = sadd.s32 %s80, 1
      %s82 = scalar_select %p79, %s80, %s81
      %p85 = pneg %p79
      %p86 = scmp.eq.s32.totalorder %s17, 1
      %p87 = por %p85, %p86
      %p88 = scmp.ne.s32.totalorder %s80, %s83
      %p89 = scmp.eq.s32.totalorder %s17, 0
      %p90 = por %p88, %p89
      %p91 = scmp.ne.s32.totalorder %s80, %s83
      %p92 = scmp.eq.s32.totalorder %s22, 1
      %p93 = por %p91, %p92
      %p94 = scmp.ne.s32.totalorder %s83, %s84
      %p95 = scmp.eq.s32.totalorder %s22, 0
      %p96 = por %p94, %p95
      %p97 = scmp.ne.s32.totalorder %s83, %s84
      %p98 = scmp.eq.s32.totalorder %s23, 1
      %p99 = por %p97, %p98
      %p101 = scmp.ne.s32.totalorder %s84, %s100
      %p102 = scmp.eq.s32.totalorder %s23, 0
      %p103 = por %p101, %p102
      %s104 = ssub.s32 %s24, %s43
      %s105 = ssub.s32 %s25, %s39
      %s106 = sor.u32 %s104, %s105
      %p107 = scmp.eq.s32.totalorder %s106, 0
      %s109 = sadd.s32 %s108, 1
      %s110 = scalar_select %p107, %s108, %s109
      %p113 = pneg %p107
      %p114 = scmp.eq.s32.totalorder %s17, 1
      %p115 = por %p113, %p114
      %p116 = scmp.ne.s32.totalorder %s108, %s111
      %p117 = scmp.eq.s32.totalorder %s17, 0
      %p118 = por %p116, %p117
      %p119 = scmp.ne.s32.totalorder %s108, %s111
      %p120 = scmp.eq.s32.totalorder %s22, 1
      %p121 = por %p119, %p120
      %p122 = scmp.ne.s32.totalorder %s111, %s112
      %p123 = scmp.eq.s32.totalorder %s22, 0
      %p124 = por %p122, %p123
      %p125 = scmp.ne.s32.totalorder %s111, %s112
      %p126 = scmp.eq.s32.totalorder %s23, 1
      %p127 = por %p125, %p126
      %p129 = scmp.ne.s32.totalorder %s112, %s128
      %p130 = scmp.eq.s32.totalorder %s23, 0
      %p131 = por %p129, %p130
      %p132 = scmp.le.s32.totalorder 1, %s17
      %p133 = scmp.lt.s32.totalorder %s17, 3
      %p134 = pnand %p132, %p133
      %p135 = pneg %p134
      // Predicated region
      $region9: #{tpu_custom_call.1} parent=5 // pred_check
        _
      $region10: #{tpu_custom_call.1} parent=5 // pred_check_branch
        %137 = sbr.rel (%p134) target = $region12
      $region11: #{tpu_custom_call.1} parent=5 // pred_region
        %s138 = ssub.s32 %s17, 1
      $region12: #{tpu_custom_call.1} parent=5 // pred_fallthru
        _
      %p139 = scmp.lt.s32.totalorder %s17, 2
      // Predicated region
      $region13: #{tpu_custom_call.1} parent=5 // pred_check
        %p140 = pneg %p139
      $region14: #{tpu_custom_call.1} parent=5 // pred_check_branch
        %142 = sbr.rel (%p140) target = $region16
      $region15: #{tpu_custom_call.1} parent=5 // pred_region
        // Predicated region
        $region17: #{tpu_custom_call.1} parent=15 // pred_check
          %p143 = pneg %p60
        $region18: #{tpu_custom_call.1} parent=15 // pred_check_branch
          %145 = sbr.rel (%p143) target = $region20
        $region19: #{tpu_custom_call.1} parent=15 // pred_region
          %s146 = sand.u32 %s50, 1
          %s147 = scalar_lea.sflag [#allocation5], %s146
          %s148 = sand.u32 %s50, 1
          %s149 = smul.addr %s148, 8
          %s150 = scalar_lea.vmem [#allocation4], %s149
          %s151 = sadd.s32 %s24, %s26
          %s153 = ssub.s32 128, 128
          %154 = vsyncadd %s147, %s153
          %s155 = sadd.s32 %s151, %s25
          %s156 = smul.addr %s155, 128
          %s157 = scalar_lea.hbm %s0, %s156
          %s159 = sshll.u32 %s150, 4
          %s160 = int_to_ptr.vmem [resolvable:$true] %s159
          %162 = dma.hbm_to_vmem [thread:$0]  %s157, 128, %s160, %s147
        $region20: #{tpu_custom_call.1} parent=15 // pred_fallthru
          _
        // Predicated region
        $region21: #{tpu_custom_call.1} parent=15 // pred_check
          %p163 = pneg %p90
        $region22: #{tpu_custom_call.1} parent=15 // pred_check_branch
          %165 = sbr.rel (%p163) target = $region24
        $region23: #{tpu_custom_call.1} parent=15 // pred_region
          %s166 = sand.u32 %s80, 1
          %s167 = scalar_lea.sflag [#allocation8], %s166
          %s168 = sand.u32 %s80, 1
          %s169 = smul.addr %s168, 8
          %s170 = scalar_lea.vmem [#allocation7], %s169
          %s171 = sadd.s32 %s24, %s26
          %s173 = ssub.s32 128, 128
          %174 = vsyncadd %s167, %s173
          %s175 = sadd.s32 %s171, %s25
          %s176 = smul.addr %s175, 128
          %s177 = scalar_lea.hbm %s1, %s176
          %s179 = sshll.u32 %s170, 4
          %s180 = int_to_ptr.vmem [resolvable:$true] %s179
          %182 = dma.hbm_to_vmem [thread:$0]  %s177, 128, %s180, %s167
        $region24: #{tpu_custom_call.1} parent=15 // pred_fallthru
          _
      $region16: #{tpu_custom_call.1} parent=5 // pred_fallthru
        _
      %p183 = scmp.le.s32.totalorder 1, %s17
      %p184 = scmp.lt.s32.totalorder %s17, 3
      %p185 = pnand %p183, %p184
      %p186 = pneg %p185
      // Predicated region
      $region25: #{tpu_custom_call.1} parent=5 // pred_check
        _
      $region26: #{tpu_custom_call.1} parent=5 // pred_check_branch
        %188 = sbr.rel (%p185) target = $region28
      $region27: #{tpu_custom_call.1} parent=5 // pred_region
        %s189 = ssub.s32 %s17, 1
        %s190 = sand.u32 %s53, 1
        %s191 = scalar_lea.sflag [#allocation5], %s190
        %s192 = sand.u32 %s53, 1
        %s193 = smul.addr %s192, 8
        %s194 = scalar_lea.vmem [#allocation4], %s193
        // Predicated region
        $region29: #{tpu_custom_call.1} parent=27 // pred_check
          %p195 = pneg %p66
        $region30: #{tpu_custom_call.1} parent=27 // pred_check_branch
          %197 = sbr.rel (%p195) target = $region32
        $region31: #{tpu_custom_call.1} parent=27 // pred_region
          %198 = dma.done %s191, 128
        $region32: #{tpu_custom_call.1} parent=27 // pred_fallthru
          _
        %s199 = sand.u32 %s83, 1
        %s200 = scalar_lea.sflag [#allocation8], %s199
        %s201 = sand.u32 %s83, 1
        %s202 = smul.addr %s201, 8
        %s203 = scalar_lea.vmem [#allocation7], %s202
        // Predicated region
        $region33: #{tpu_custom_call.1} parent=27 // pred_check
          %p204 = pneg %p96
        $region34: #{tpu_custom_call.1} parent=27 // pred_check_branch
          %206 = sbr.rel (%p204) target = $region36
        $region35: #{tpu_custom_call.1} parent=27 // pred_region
          %207 = dma.done %s200, 128
        $region36: #{tpu_custom_call.1} parent=27 // pred_fallthru
          _
        %s208 = sand.u32 %s53, 1
        %s209 = scalar_lea.sflag [#allocation5], %s208
        %s210 = sand.u32 %s53, 1
        %s211 = smul.addr %s210, 8
        %s212 = scalar_lea.vmem [#allocation4], %s211
        %p213 = pneg %p66
        %p214 = pneg %p63
        %s215 = sand.u32 %s83, 1
        %s216 = scalar_lea.sflag [#allocation8], %s215
        %s217 = sand.u32 %s83, 1
        %s218 = smul.addr %s217, 8
        %s219 = scalar_lea.vmem [#allocation7], %s218
        %p220 = pneg %p96
        %p221 = pneg %p93
        %p222 = pneg %p124
        %p223 = pneg %p121
        %s224 = sand.u32 %s111, 1
        %s225 = scalar_lea.sflag [#allocation6], %s224
        %s226 = sand.u32 %s111, 1
        %s227 = scalar_lea.vmem [#allocation9], %s226
        %s228 = sadd.s32 %s27, %s29
        %s229 = sadd.s32 %s27, %s29
        %p230 = scmp.eq.s32.totalorder %s29, 0
        // Predicated region
        $region37: #{tpu_custom_call.1} parent=27 // pred_check
          %p231 = pneg %p230
        $region38: #{tpu_custom_call.1} parent=27 // pred_check_branch
          %233 = sbr.rel (%p231) target = $region40
        $region39: #{tpu_custom_call.1} parent=27 // pred_region
          %234 = vst [vmem:[#allocation2] sm:$0xff] 0.0
          %235 = vst [vmem:[#allocation3] sm:$0xff] 0.0
        $region40: #{tpu_custom_call.1} parent=27 // pred_fallthru
          _
        %v236 = vld [vmem:[%s194] sm:$0xff]
        %v237 = vld [vmem:[%s203] sm:$0xff]
        %v238 = vmul.f32 %v236, %v237
        %v239 = vmul.f32 %v236, %v236
        %v240 = vmul.f32 %v237, %v237
        %v241 = vadd.f32 %v239, %v240
        %v242 = vld [vmem:[#allocation2] sm:$0xff]
        %v243 = vadd.f32 %v238, 0.0
        %v244 = vadd.f32 %v242, %v243
        %245 = vst [vmem:[#allocation2] sm:$0xff] %v244
        %v246 = vld [vmem:[#allocation3] sm:$0xff]
        %v247 = vadd.f32 %v241, 0.0
        %v248 = vadd.f32 %v246, %v247
        %249 = vst [vmem:[#allocation3] sm:$0xff] %v248
        // Predicated region
        $region41: #{tpu_custom_call.1} parent=27 // pred_check
          %p250 = pneg %p230
        $region42: #{tpu_custom_call.1} parent=27 // pred_check_branch
          %252 = sbr.rel (%p250) target = $region44
        $region43: #{tpu_custom_call.1} parent=27 // pred_region
          %v253 = vld [vmem:[#allocation2] sm:$0xff]
          %254 = vadd.xlane.f32.xlu0 %v253
          %v255 = vpop.xlane.xlu0 %254
          %v256 = vrot.slane %v255, 4
          %v257 = vadd.f32 %v255, %v256
          %v258 = vrot.slane %v257, 2
          %v259 = vadd.f32 %v257, %v258
          %v260 = vrot.slane %v259, 1
          %v261 = vadd.f32 %v259, %v260
          %s262 = vtos %v261
          %v263 = vld [vmem:[#allocation3] sm:$0xff]
          %264 = vadd.xlane.f32.xlu0 %v263
          %v265 = vpop.xlane.xlu0 %264
          %v266 = vrot.slane %v265, 4
          %v267 = vadd.f32 %v265, %v266
          %v268 = vrot.slane %v267, 2
          %v269 = vadd.f32 %v267, %v268
          %v270 = vrot.slane %v269, 1
          %v271 = vadd.f32 %v269, %v270
          %s272 = vtos %v271
          %v273 = vlaneseq
          %v274 = vand.u32 %v273, 127
          %vm275 = vcmp.eq.s32.totalorder %v274, 0
          %vm276 = vcmp.eq.s32.totalorder %v274, 1
          %v277 = vstv %s272
          %v278 = vsel %vm276, %v277, 0.0
          %v279 = vstv %s262
          %v280 = vsel %vm275, %v279, %v278
          %281 = vst [vmem:[%s227] sm:$0x1] %v280
        $region44: #{tpu_custom_call.1} parent=27 // pred_fallthru
          _
        %s282 = sand.u32 %s111, 1
        %s283 = scalar_lea.sflag [#allocation6], %s282
        %s284 = sand.u32 %s111, 1
        %s285 = scalar_lea.vmem [#allocation9], %s284
        // Predicated region
        $region45: #{tpu_custom_call.1} parent=27 // pred_check
          %p286 = pneg %p121
        $region46: #{tpu_custom_call.1} parent=27 // pred_check_branch
          %288 = sbr.rel (%p286) target = $region48
        $region47: #{tpu_custom_call.1} parent=27 // pred_region
          %s290 = ssub.s32 16, 16
          %291 = vsyncadd %s283, %s290
          %s292 = smul.addr %s27, 2
          %s293 = sadd.s32 %s28, %s292
          %s294 = smul.addr %s293, 16
          %s295 = scalar_lea.hbm %s2, %s294
          %s297 = sshll.u32 %s285, 4
          %s298 = int_to_ptr.vmem [resolvable:$true] %s297
          %300 = dma.vmem_to_hbm [thread:$0]  %s298, 16, %s295, %s283
        $region48: #{tpu_custom_call.1} parent=27 // pred_fallthru
          _
      $region28: #{tpu_custom_call.1} parent=5 // pred_fallthru
        _
      %p301 = scmp.le.s32.totalorder 2, %s17
      // Predicated region
      $region49: #{tpu_custom_call.1} parent=5 // pred_check
        %p302 = pneg %p301
      $region50: #{tpu_custom_call.1} parent=5 // pred_check_branch
        %304 = sbr.rel (%p302) target = $region52
      $region51: #{tpu_custom_call.1} parent=5 // pred_region
        %s305 = ssub.s32 %s17, 2
        // Predicated region
        $region53: #{tpu_custom_call.1} parent=51 // pred_check
          %p306 = pneg %p127
        $region54: #{tpu_custom_call.1} parent=51 // pred_check_branch
          %308 = sbr.rel (%p306) target = $region56
        $region55: #{tpu_custom_call.1} parent=51 // pred_region
          %s309 = sand.u32 %s112, 1
          %s310 = scalar_lea.sflag [#allocation6], %s309
          %s311 = sand.u32 %s112, 1
          %s312 = scalar_lea.vmem [#allocation9], %s311
          %313 = dma.done %s310, 16
        $region56: #{tpu_custom_call.1} parent=51 // pred_fallthru
          _
      $region52: #{tpu_custom_call.1} parent=5 // pred_fallthru
        _
    $region6: #{tpu_custom_call.1} parent=1 // loop_footer
      %s21 = sadd.s32 1, %s17
    $region7: #{tpu_custom_call.1} parent=1 // loop_footer_branch
      %16 = sbr.rel target = $region3
    $region8: #{tpu_custom_call.1} parent=1 // loop_exit
      _
    %314 = vsyncpa [#allocation5], 1
    %s315 = scalar_lea.sflag [#allocation5], 1
    %316 = vsyncpa %s315, 1
    %317 = vsyncpa [#allocation8], 1
    %s318 = scalar_lea.sflag [#allocation8], 1
    %319 = vsyncpa %s318, 1
    %320 = vsyncpa [#allocation6], 1
    %s321 = scalar_lea.sflag [#allocation6], 1
    %322 = vsyncpa %s321, 1

</llo_original>
